<compile_context>
chip_gen: v7x
topology: tpu7x:2x2x1
jax: 0.10.0
libtpu: 0.0.40
codegen_flags: <defaults>
</compile_context>

<pallas_src>
import math

import jax
import jax.numpy as jnp
from jax.experimental import pallas as pl
from jax.experimental.pallas import tpu as pltpu


# ----------------------------------------------------------------------------
# Buffer setup (mirrors PositionalEncoding.__init__ / register_buffer).
# ----------------------------------------------------------------------------
def _build_pe(out_dim: int, max_len: int = 1) -> jnp.ndarray:
    """pe of shape (1, max_len, 1, out_dim), float32 (as in the PyTorch code)."""
    assert out_dim % 2 == 0, "out_dim must be even (PyTorch code assumes this)"
    position = jnp.arange(0, max_len, dtype=jnp.float32)[:, None]            # (L, 1)
    div_term = jnp.exp(
        jnp.arange(0, out_dim, 2, dtype=jnp.float32) * (-math.log(10000.0) / out_dim)
    )                                                                         # (D/2,)
    angles = position * div_term                                              # (L, D/2)
    pe = jnp.zeros((max_len, out_dim), dtype=jnp.float32)
    pe = pe.at[:, 0::2].set(jnp.sin(angles))
    pe = pe.at[:, 1::2].set(jnp.cos(angles))
    return pe[None, :, None, :]                                               # (1,L,1,D)


def init_positional_encoding(out_dim: int, num_nodes: int, max_len: int = 1,
                             dtype=jnp.float32) -> jnp.ndarray:
    """One-time setup: pe expanded over the node axis, lane-dense (T, N*D).

    This is the register_buffer analogue; doing the node broadcast here (once)
    keeps it out of the per-forward HBM traffic.
    NOTE: pe is cast to the activation dtype; with bf16 activations this differs
    negligibly from PyTorch, where the f32 buffer promotes the add.
    """
    pe = _build_pe(out_dim, max_len)                                          # (1,T,1,D) f32
    pe_nd = jnp.broadcast_to(pe, (1, max_len, num_nodes, out_dim))
    pe_nd = pe_nd.reshape(max_len, num_nodes * out_dim)
    return pe_nd.astype(dtype)


# ----------------------------------------------------------------------------
# Kernel + wrapper.
# ----------------------------------------------------------------------------
# Sublane packing per dtype itemsize (f32 -> 8, bf16 -> 16, int8/fp8 -> 32).
_SUBLANE_ALIGN = {4: 8, 2: 16, 1: 32}

_SUB_TILE_MAX = 512            # max sublane (T) tile when T is very large
_BLOCK_BYTE_TARGET = 2 << 20   # ~2 MiB blocks: ~85%-of-roofline regime for f32 add
_MIN_GRID_STEPS = 8            # keep both v7x TensorCores fed when B*T is tiny


def _cdiv(a: int, b: int) -> int:
    return -(-a // b)


def _pick_tile(size: int, target: int, align: int) -> int:
    """Full extent whenever it fits the target (full-extent blocks are exempt
    from the (8,128) divisibility rule); otherwise the largest aligned tile."""
    if size <= target:
        return size
    return max(align, (target // align) * align)


def _pos_enc_kernel(x_ref, pe_ref, o_ref):
    # x_ref / o_ref: (tT, tL) tile of one batch element (batch dim squeezed)
    # pe_ref:        (tT, tL) matching tile of the node-expanded pe
    o_ref[...] = x_ref[...] + pe_ref[...]


def _positional_encoding(x: jnp.ndarray, pe_nd: jnp.ndarray) -> jnp.ndarray:
    """x: (B, T, N, D); pe_nd: (T, N*D) from init_positional_encoding."""
    B, T, N, D = x.shape
    ND = N * D
    assert pe_nd.shape == (T, ND)

    # Lane-dense fold; pure contiguous collapse -> bitcast, aliasing survives.
    x2 = x.reshape(B, T, ND)
    pe2 = pe_nd.astype(x.dtype)

    itemsize = jnp.dtype(x.dtype).itemsize
    sub_align = _SUBLANE_ALIGN.get(itemsize, 8)

    # Sublane (T) tile: full extent unless T is very large (AFDGCN: T ~ 12).
    tT = _pick_tile(T, _SUB_TILE_MAX, sub_align)
    n_t = _cdiv(T, tT)

    # Lane tile: sized so one block is ~_BLOCK_BYTE_TARGET; full extent if it fits.
    lane_budget = max(128, _BLOCK_BYTE_TARGET // (tT * itemsize))
    tL = _pick_tile(ND, lane_budget, 128)

    # Keep >= ~_MIN_GRID_STEPS grid steps so v7x's two TensorCores both get work
    # when B and T are small (grid parallelism is the only cross-core sharding
    # here).  No-op for realistic batch sizes.
    steps = B * n_t * _cdiv(ND, tL)
    if steps < _MIN_GRID_STEPS and ND > 128:
        want = _cdiv(_MIN_GRID_STEPS, B * n_t)
        tL = min(tL, max(128, _cdiv(_cdiv(ND, want), 128) * 128))

    grid = (n_t, _cdiv(ND, tL), B)   # batch innermost: pe block reused across B

    out2 = pl.pallas_call(
        _pos_enc_kernel,
        out_shape=jax.ShapeDtypeStruct((B, T, ND), x.dtype),
        grid_spec=pltpu.PrefetchScalarGridSpec(
            num_scalar_prefetch=0,
            grid=grid,
            in_specs=[
                # x: batch dim squeezed out of the kernel ref
                pl.BlockSpec((pl.Squeezed(), tT, tL), lambda t, l, b: (b, t, l)),
                # pe: shared across batch; with b innermost its block index is
                # unchanged across the batch sweep, so it is DMA'd only once
                # per (t, l) tile -> pe read from HBM exactly once per forward.
                pl.BlockSpec((tT, tL), lambda t, l, b: (t, l)),
            ],
            out_specs=pl.BlockSpec((pl.Squeezed(), tT, tL), lambda t, l, b: (b, t, l)),
        ),
        # The op is x += pe: alias x to the output.  Zero extra HBM traffic when
        # the caller donates x; XLA inserts a protective copy otherwise.
        input_output_aliases={0: 0},
        compiler_params=pltpu.CompilerParams(
            # Pure elementwise op -> every grid axis is independent; lets the
            # v7x megacore shard the grid (measured no-op on v5e/v6e).
            dimension_semantics=("parallel", "parallel", "parallel"),
            # Worst case ~12 MiB (3 arrays x 2 buffers x ~2 MiB): well inside
            # the scoped default on every generation, incl. v7x (64 MiB total).
            vmem_limit_bytes=32 * 1024 * 1024,
        ),
    )(x2, pe2)

    return out2.reshape(B, T, N, D)


# Public entry point: donate x at the jit boundary so the in-kernel aliasing
# actually sticks (no protective copy / no extra S bytes of HBM traffic).
# Callers that still need x afterwards should jit without donation.
positional_encoding = jax.jit(_positional_encoding, donate_argnums=(0,))


if __name__ == "__main__":
    # Primary test: (8,128)-friendly shapes (T=8 sublanes, N*D=512 lanes).
    B, T, N, D = 2, 8, 16, 32
    key = jax.random.PRNGKey(0)
    x = jax.random.normal(key, (B, T, N, D), dtype=jnp.float32)
    pe4 = _build_pe(out_dim=D, max_len=T)                       # reference buffer
    pe_nd = init_positional_encoding(out_dim=D, num_nodes=N, max_len=T, dtype=x.dtype)

    ref = x + pe4                                # computed BEFORE x is donated
    out = jax.block_until_ready(positional_encoding(x, pe_nd))
    assert out.shape == (B, T, N, D)
    assert jnp.allclose(out, ref, atol=1e-6), "mismatch vs reference"

    # Secondary test: non-(8,128)-divisible shapes -> exercises full-extent
    # sublane blocks and padded partial lane tiles (masked stores).
    B2, T2, N2, D2 = 2, 5, 10, 20
    x_b = jax.random.normal(jax.random.PRNGKey(1), (B2, T2, N2, D2), dtype=jnp.float32)
    pe4_b = _build_pe(out_dim=D2, max_len=T2)
    pe_nd_b = init_positional_encoding(out_dim=D2, num_nodes=N2, max_len=T2, dtype=x_b.dtype)
    ref_b = x_b + pe4_b                          # computed BEFORE x_b is donated
    out_b = jax.block_until_ready(positional_encoding(x_b, pe_nd_b))
    assert jnp.allclose(out_b, ref_b, atol=1e-6), "mismatch vs reference (padded tiles)"

    print("KERNEL_OK")
</pallas_src>

<mosaic_0001>
module attributes {stable_mosaic.version = 11 : i64} {
  func.func @_pos_enc_kernel(%arg0: i32, %arg1: i32, %arg2: i32, %arg3: memref<1x8x128xf32, #tpu.memory_space<vmem>>, %arg4: memref<8x128xf32, #tpu.memory_space<vmem>>, %arg5: memref<1x8x128xf32, #tpu.memory_space<vmem>>) attributes {dimension_semantics = [#tpu.dimension_semantics<parallel>, #tpu.dimension_semantics<parallel>, #tpu.dimension_semantics<parallel>], iteration_bounds = array<i64: 1, 4, 2>, scalar_prefetch = 0 : i64, scratch_operands = 0 : i64, tpu.core_type = #tpu.core_type<tc>, window_params = [{transform_indices = @transform_0, window_bounds = array<i64: 1, 8, 128>}, {transform_indices = @transform_1, window_bounds = array<i64: 8, 128>}, {transform_indices = @transform_2, window_bounds = array<i64: 1, 8, 128>}]} {
    %c0 = arith.constant 0 : index
    %c0_0 = arith.constant 0 : index
    %c0_1 = arith.constant 0 : index
    %0 = vector.load %arg3[%c0, %c0_0, %c0_1] : memref<1x8x128xf32, #tpu.memory_space<vmem>>, vector<1x8x128xf32>
    %1 = vector.shape_cast %0 : vector<1x8x128xf32> to vector<8x128xf32>
    %c0_2 = arith.constant 0 : index
    %c0_3 = arith.constant 0 : index
    %2 = vector.load %arg4[%c0_2, %c0_3] : memref<8x128xf32, #tpu.memory_space<vmem>>, vector<8x128xf32>
    %3 = arith.addf %1, %2 : vector<8x128xf32>
    %c0_4 = arith.constant 0 : index
    %c0_5 = arith.constant 0 : index
    %c0_6 = arith.constant 0 : index
    %4 = vector.load %arg5[%c0_4, %c0_5, %c0_6] : memref<1x8x128xf32, #tpu.memory_space<vmem>>, vector<1x8x128xf32>
    %5 = vector.shape_cast %4 : vector<1x8x128xf32> to vector<8x128xf32>
    %6 = vector.shape_cast %3 : vector<8x128xf32> to vector<1x8x128xf32>
    tpu.vector_store %arg5[%c0_4, %c0_5, %c0_6], %6 {strides = array<i32>} : memref<1x8x128xf32, #tpu.memory_space<vmem>>, vector<1x8x128xf32>,
    return
  }
  func.func @transform_0(%arg0: i32, %arg1: i32, %arg2: i32) -> (i32, i32, i32) {
    %c0_i32 = arith.constant 0 : i32
    return %arg2, %arg0, %arg1 : i32, i32, i32
  }
  func.func @transform_1(%arg0: i32, %arg1: i32, %arg2: i32) -> (i32, i32) {
    %c0_i32 = arith.constant 0 : i32
    return %arg0, %arg1 : i32, i32
  }
  func.func @transform_2(%arg0: i32, %arg1: i32, %arg2: i32) -> (i32, i32, i32) {
    %c0_i32 = arith.constant 0 : i32
    return %arg2, %arg0, %arg1 : i32, i32, i32
  }
}

</mosaic_0001>

<llo_original>
// kernel: _positional_encoding.1
$region0: #{_positional_encoding.1}
  #allocation0 [shape = 'u32[]', space=smem, size = 0x4, offset = 0x4, fixed_abs, tag = 'smem constant byte address 0x4 - core index']
  #allocation1 [shape = 'u32[144,128]{1,0:T(1,128)}', space=vmem, size = 0x12000, scoped, tag = 'internal scratch']
  %s0 = inlined_call_operand.vmem [shape: f32[2,8,512], index: 0, kind: input, shape index: {}, may-alias: {0,2}]
  %s1 = inlined_call_operand.vmem [shape: f32[8,512], index: 1, kind: input, shape index: {}]
  %s2 = inlined_call_operand.vmem [shape: f32[2,8,512], index: 2, kind: output, shape index: {}, may-alias: {0,2}]
  %s3 = sld [smem:[#allocation0]]
  $region41: #{_positional_encoding.1} parent=0
    _
  %s5 = ssub.s32 1, %s3
  %s6 = scalar_select 0, %s5, %s3
  loop: start=0, step=1, limit=10
  $region2: #{_positional_encoding.1} parent=0 // loop_pre_header
    _
  $region3: #{_positional_encoding.1} parent=0 // loop_header
    %s8 = sphi 0, %s12
    %p9 = scmp.ge.s32.totalorder %s8, 10
    %s15 = sphi 0, %s34
    %s16 = sphi 0, %s30
    %s17 = sphi 0, %s26
    %s18 = sphi 0, %s15
    %s19 = sphi 0, %s16
    %s20 = sphi 0, %s17
    %s21 = sphi 0, %s18
    %s22 = sphi 0, %s19
    %s23 = sphi 0, %s20
    %s41 = sphi 0, %s43
    %s44 = sphi 0, %s41
    %s45 = sphi 0, %s44
    %s61 = sphi 0, %s45
    %s69 = sphi 0, %s71
    %s72 = sphi 0, %s69
    %s73 = sphi 0, %s72
    %s89 = sphi 0, %s73
    %s99 = sphi 0, %s101
    %s102 = sphi 0, %s99
    %s103 = sphi 0, %s102
    %s119 = sphi 0, %s103
  $region4: #{_positional_encoding.1} parent=0 // loop_header_branch
    %11 = sbr.rel (%p9) target = $region8
  $region5: #{_positional_encoding.1} parent=0 // loop_body
    %s13 = ssub.s32 %s8, 1
    %s14 = ssub.s32 %s8, 2
    %s24 = sadd.s32 1, %s17
    %p25 = scmp.ge.s32.totalorder %s24, 2
    %s26 = scalar_select %p25, 0, %s24
    %s27 = sadd.s32 1, %s16
    %s28 = scalar_select %p25, %s27, %s16
    %p29 = scmp.ge.s32.totalorder %s28, 4
    %s30 = scalar_select %p29, 0, %s28
    %s31 = sadd.s32 1, %s15
    %s32 = scalar_select %p29, %s31, %s15
    %p33 = scmp.ge.s32.totalorder %s32, 1
    %s34 = scalar_select %p33, 0, %s32
    %s35 = ssub.s32 %s17, %s26
    %s36 = ssub.s32 %s15, %s34
    %s37 = sor.u32 %s35, %s36
    %s38 = ssub.s32 %s16, %s30
    %s39 = sor.u32 %s37, %s38
    %p40 = scmp.eq.s32.totalorder %s39, 0
    %s42 = sadd.s32 %s41, 1
    %s43 = scalar_select %p40, %s41, %s42
    %p46 = pneg %p40
    %p47 = scmp.eq.s32.totalorder %s8, 7
    %p48 = por %p46, %p47
    %p49 = scmp.ne.s32.totalorder %s41, %s44
    %p50 = scmp.eq.s32.totalorder %s8, 0
    %p51 = por %p49, %p50
    %p52 = scmp.ne.s32.totalorder %s41, %s44
    %p53 = scmp.eq.s32.totalorder %s13, 7
    %p54 = por %p52, %p53
    %p55 = scmp.ne.s32.totalorder %s44, %s45
    %p56 = scmp.eq.s32.totalorder %s13, 0
    %p57 = por %p55, %p56
    %p58 = scmp.ne.s32.totalorder %s44, %s45
    %p59 = scmp.eq.s32.totalorder %s14, 7
    %p60 = por %p58, %p59
    %p62 = scmp.ne.s32.totalorder %s45, %s61
    %p63 = scmp.eq.s32.totalorder %s14, 0
    %p64 = por %p62, %p63
    %s65 = ssub.s32 %s15, %s34
    %s66 = ssub.s32 %s16, %s30
    %s67 = sor.u32 %s65, %s66
    %p68 = scmp.eq.s32.totalorder %s67, 0
    %s70 = sadd.s32 %s69, 1
    %s71 = scalar_select %p68, %s69, %s70
    %p74 = pneg %p68
    %p75 = scmp.eq.s32.totalorder %s8, 7
    %p76 = por %p74, %p75
    %p77 = scmp.ne.s32.totalorder %s69, %s72
    %p78 = scmp.eq.s32.totalorder %s8, 0
    %p79 = por %p77, %p78
    %p80 = scmp.ne.s32.totalorder %s69, %s72
    %p81 = scmp.eq.s32.totalorder %s13, 7
    %p82 = por %p80, %p81
    %p83 = scmp.ne.s32.totalorder %s72, %s73
    %p84 = scmp.eq.s32.totalorder %s13, 0
    %p85 = por %p83, %p84
    %p86 = scmp.ne.s32.totalorder %s72, %s73
    %p87 = scmp.eq.s32.totalorder %s14, 7
    %p88 = por %p86, %p87
    %p90 = scmp.ne.s32.totalorder %s73, %s89
    %p91 = scmp.eq.s32.totalorder %s14, 0
    %p92 = por %p90, %p91
    %s93 = ssub.s32 %s17, %s26
    %s94 = ssub.s32 %s15, %s34
    %s95 = sor.u32 %s93, %s94
    %s96 = ssub.s32 %s16, %s30
    %s97 = sor.u32 %s95, %s96
    %p98 = scmp.eq.s32.totalorder %s97, 0
    %s100 = sadd.s32 %s99, 1
    %s101 = scalar_select %p98, %s99, %s100
    %p104 = pneg %p98
    %p105 = scmp.eq.s32.totalorder %s8, 7
    %p106 = por %p104, %p105
    %p107 = scmp.ne.s32.totalorder %s99, %s102
    %p108 = scmp.eq.s32.totalorder %s8, 0
    %p109 = por %p107, %p108
    %p110 = scmp.ne.s32.totalorder %s99, %s102
    %p111 = scmp.eq.s32.totalorder %s13, 7
    %p112 = por %p110, %p111
    %p113 = scmp.ne.s32.totalorder %s102, %s103
    %p114 = scmp.eq.s32.totalorder %s13, 0
    %p115 = por %p113, %p114
    %p116 = scmp.ne.s32.totalorder %s102, %s103
    %p117 = scmp.eq.s32.totalorder %s14, 7
    %p118 = por %p116, %p117
    %p120 = scmp.ne.s32.totalorder %s103, %s119
    %p121 = scmp.eq.s32.totalorder %s14, 0
    %p122 = por %p120, %p121
    %p123 = scmp.le.s32.totalorder 1, %s8
    %p124 = scmp.lt.s32.totalorder %s8, 9
    %p125 = pnand %p123, %p124
    %p126 = pneg %p125
    // Predicated region
    $region9: #{_positional_encoding.1} parent=5 // pred_check
      _
    $region10: #{_positional_encoding.1} parent=5 // pred_check_branch
      %128 = sbr.rel (%p125) target = $region12
    $region11: #{_positional_encoding.1} parent=5 // pred_region
      %s129 = ssub.s32 %s8, 1
    $region12: #{_positional_encoding.1} parent=5 // pred_fallthru
      _
    %p130 = scmp.lt.s32.totalorder %s8, 8
    // Predicated region
    $region13: #{_positional_encoding.1} parent=5 // pred_check
      %p131 = pneg %p130
    $region14: #{_positional_encoding.1} parent=5 // pred_check_branch
      %133 = sbr.rel (%p131) target = $region16
    $region15: #{_positional_encoding.1} parent=5 // pred_region
      // Predicated region
      $region17: #{_positional_encoding.1} parent=15 // pred_check
        %p134 = pneg %p51
      $region18: #{_positional_encoding.1} parent=15 // pred_check_branch
        %136 = sbr.rel (%p134) target = $region20
      $region19: #{_positional_encoding.1} parent=15 // pred_region
        %p137 = scmp.lt.s32.totalorder %s17, 1
        %s138 = scalar_select %p137, %s17, 1
        %p139 = scmp.lt.s32.totalorder %s15, 0
        %s140 = scalar_select %p139, %s15, 0
        %p141 = scmp.lt.s32.totalorder %s16, 3
        %s142 = scalar_select %p141, %s16, 3
        %s143 = smul.addr %s140, 4
        %s144 = sadd.s32 %s142, %s143
        %s145 = smul.addr %s138, 4
        %s146 = sadd.s32 %s144, %s145
        %s147 = smul.addr %s146, 8
        %s148 = scalar_lea.vmem %s0, %s147
      $region20: #{_positional_encoding.1} parent=15 // pred_fallthru
        _
      // Predicated region
      $region21: #{_positional_encoding.1} parent=15 // pred_check
        %p149 = pneg %p79
      $region22: #{_positional_encoding.1} parent=15 // pred_check_branch
        %151 = sbr.rel (%p149) target = $region24
      $region23: #{_positional_encoding.1} parent=15 // pred_region
        %p152 = scmp.lt.s32.totalorder %s15, 0
        %s153 = scalar_select %p152, %s15, 0
        %p154 = scmp.lt.s32.totalorder %s16, 3
        %s155 = scalar_select %p154, %s16, 3
        %s156 = smul.addr %s153, 4
        %s157 = sadd.s32 %s155, %s156
        %s158 = smul.addr %s157, 8
        %s159 = scalar_lea.vmem %s1, %s158
      $region24: #{_positional_encoding.1} parent=15 // pred_fallthru
        _
    $region16: #{_positional_encoding.1} parent=5 // pred_fallthru
      _
    %p160 = scmp.le.s32.totalorder 1, %s8
    %p161 = scmp.lt.s32.totalorder %s8, 9
    %p162 = pnand %p160, %p161
    %p163 = pneg %p162
    // Predicated region
    $region25: #{_positional_encoding.1} parent=5 // pred_check
      _
    $region26: #{_positional_encoding.1} parent=5 // pred_check_branch
      %165 = sbr.rel (%p162) target = $region28
    $region27: #{_positional_encoding.1} parent=5 // pred_region
      %s166 = ssub.s32 %s8, 1
      %p167 = scmp.lt.s32.totalorder %s20, 1
      %s168 = scalar_select %p167, %s20, 1
      %p169 = scmp.lt.s32.totalorder %s18, 0
      %s170 = scalar_select %p169, %s18, 0
      %p171 = scmp.lt.s32.totalorder %s19, 3
      %s172 = scalar_select %p171, %s19, 3
      %s173 = smul.addr %s170, 4
      %s174 = sadd.s32 %s172, %s173
      %s175 = smul.addr %s168, 4
      %s176 = sadd.s32 %s174, %s175
      %s177 = smul.addr %s176, 8
      %s178 = scalar_lea.vmem %s0, %s177
      %p179 = pneg %p57
      %p180 = pneg %p54
      %p181 = scmp.lt.s32.totalorder %s18, 0
      %s182 = scalar_select %p181, %s18, 0
      %p183 = scmp.lt.s32.totalorder %s19, 3
      %s184 = scalar_select %p183, %s19, 3
      %s185 = smul.addr %s182, 4
      %s186 = sadd.s32 %s184, %s185
      %s187 = smul.addr %s186, 8
      %s188 = scalar_lea.vmem %s1, %s187
      %p189 = pneg %p85
      %p190 = pneg %p82
      %p191 = pneg %p115
      %p192 = pneg %p112
      %p193 = scmp.lt.s32.totalorder %s20, 1
      %s194 = scalar_select %p193, %s20, 1
      %p195 = scmp.lt.s32.totalorder %s18, 0
      %s196 = scalar_select %p195, %s18, 0
      %p197 = scmp.lt.s32.totalorder %s19, 3
      %s198 = scalar_select %p197, %s19, 3
      %s199 = smul.addr %s196, 4
      %s200 = sadd.s32 %s198, %s199
      %s201 = smul.addr %s194, 4
      %s202 = sadd.s32 %s200, %s201
      %s203 = smul.addr %s202, 8
      %s204 = scalar_lea.vmem %s2, %s203
      %p205 = scmp.lt.s32.totalorder %s20, 1
      %s206 = scalar_select %p205, %s20, 1
      %p207 = scmp.lt.s32.totalorder %s18, 0
      %s208 = scalar_select %p207, %s18, 0
      %p209 = scmp.lt.s32.totalorder %s19, 3
      %s210 = scalar_select %p209, %s19, 3
      %s211 = smul.addr %s208, 4
      %s212 = sadd.s32 %s210, %s211
      %s213 = smul.addr %s206, 4
      %s214 = sadd.s32 %s212, %s213
      %s215 = smul.addr %s214, 8
      %s216 = scalar_lea.vmem %s0, %s215
      %p217 = scmp.lt.s32.totalorder %s18, 0
      %s218 = scalar_select %p217, %s18, 0
      %p219 = scmp.lt.s32.totalorder %s19, 3
      %s220 = scalar_select %p219, %s19, 3
      %s221 = smul.addr %s218, 4
      %s222 = sadd.s32 %s220, %s221
      %s223 = smul.addr %s222, 8
      %s224 = scalar_lea.vmem %s1, %s223
      %p225 = scmp.lt.s32.totalorder %s20, 1
      %s226 = scalar_select %p225, %s20, 1
      %p227 = scmp.lt.s32.totalorder %s18, 0
      %s228 = scalar_select %p227, %s18, 0
      %p229 = scmp.lt.s32.totalorder %s19, 3
      %s230 = scalar_select %p229, %s19, 3
      %s231 = smul.addr %s228, 4
      %s232 = sadd.s32 %s230, %s231
      %s233 = smul.addr %s226, 4
      %s234 = sadd.s32 %s232, %s233
      %s235 = smul.addr %s234, 8
      %s236 = scalar_lea.vmem %s2, %s235
      %v237 = vld [vmem:[%s216] sm:$0xff]
      %v238 = vld [vmem:[%s224] sm:$0xff]
      %v239 = vadd.f32 %v237, %v238
      %240 = vst [vmem:[%s236] sm:$0xff] %v239
      %p241 = scmp.lt.s32.totalorder %s20, 1
      %s242 = scalar_select %p241, %s20, 1
      %p243 = scmp.lt.s32.totalorder %s18, 0
      %s244 = scalar_select %p243, %s18, 0
      %p245 = scmp.lt.s32.totalorder %s19, 3
      %s246 = scalar_select %p245, %s19, 3
      %s247 = smul.addr %s244, 4
      %s248 = sadd.s32 %s246, %s247
      %s249 = smul.addr %s242, 4
      %s250 = sadd.s32 %s248, %s249
      %s251 = smul.addr %s250, 8
      %s252 = scalar_lea.vmem %s2, %s251
      // Predicated region
      $region29: #{_positional_encoding.1} parent=27 // pred_check
        %p253 = pneg %p112
      $region30: #{_positional_encoding.1} parent=27 // pred_check_branch
        %255 = sbr.rel (%p253) target = $region32
      $region31: #{_positional_encoding.1} parent=27 // pred_region
        _
      $region32: #{_positional_encoding.1} parent=27 // pred_fallthru
        _
    $region28: #{_positional_encoding.1} parent=5 // pred_fallthru
      _
    %p256 = scmp.le.s32.totalorder 2, %s8
    // Predicated region
    $region33: #{_positional_encoding.1} parent=5 // pred_check
      %p257 = pneg %p256
    $region34: #{_positional_encoding.1} parent=5 // pred_check_branch
      %259 = sbr.rel (%p257) target = $region36
    $region35: #{_positional_encoding.1} parent=5 // pred_region
      %s260 = ssub.s32 %s8, 2
      // Predicated region
      $region37: #{_positional_encoding.1} parent=35 // pred_check
        %p261 = pneg %p118
      $region38: #{_positional_encoding.1} parent=35 // pred_check_branch
        %263 = sbr.rel (%p261) target = $region40
      $region39: #{_positional_encoding.1} parent=35 // pred_region
        %p264 = scmp.lt.s32.totalorder %s23, 1
        %s265 = scalar_select %p264, %s23, 1
        %p266 = scmp.lt.s32.totalorder %s21, 0
        %s267 = scalar_select %p266, %s21, 0
        %p268 = scmp.lt.s32.totalorder %s22, 3
        %s269 = scalar_select %p268, %s22, 3
        %s270 = smul.addr %s267, 4
        %s271 = sadd.s32 %s269, %s270
        %s272 = smul.addr %s265, 4
        %s273 = sadd.s32 %s271, %s272
        %s274 = smul.addr %s273, 8
        %s275 = scalar_lea.vmem %s2, %s274
      $region40: #{_positional_encoding.1} parent=35 // pred_fallthru
        _
    $region36: #{_positional_encoding.1} parent=5 // pred_fallthru
      _
  $region6: #{_positional_encoding.1} parent=0 // loop_footer
    %s12 = sadd.s32 1, %s8
  $region7: #{_positional_encoding.1} parent=0 // loop_footer_branch
    %7 = sbr.rel target = $region3
  $region8: #{_positional_encoding.1} parent=0 // loop_exit
    _

</llo_original>
